<compile_context>
chip_gen: v6e
topology: v6e:2x2x1
jax: 0.10.0
libtpu: 0.0.40
codegen_flags: <defaults>
</compile_context>

<pallas_src>
import functools

import jax
import jax.numpy as jnp
from jax.experimental import pallas as pl
from jax.experimental.pallas import tpu as pltpu


def mlp_kernel(x_ref, w0_ref, b0_ref, w1_ref, b1_ref, w2_ref, b2_ref, o_ref):
    # x_ref:  (TB, F)  f32    w0_ref: (H0, F)  f32   b0_ref: (H0, 1) f32
    # w1_ref: (H1, H0) f32    b1_ref: (H1, 1)  f32
    # w2_ref: (H1, 1)  f32    b2_ref: (1, 1)   f32   o_ref:  (1, TB) f32
    #
    # fc0 + ReLU: contract the feature axis of both operands -> feature-major (H0, TB).
    h0 = jax.lax.dot_general(
        w0_ref[...], x_ref[...], (((1,), (1,)), ((), ())),
        preferred_element_type=jnp.float32)
    h0 = jnp.maximum(h0 + b0_ref[...], 0.0)                          # (H0, TB)
    # TODO(synk): nn.Dropout(p=0.7) treated as identity (eval/inference semantics).
    # fc1 + ReLU
    h1 = jnp.dot(w1_ref[...], h0, preferred_element_type=jnp.float32)
    h1 = jnp.maximum(h1 + b1_ref[...], 0.0)                          # (H1, TB)
    # out layer (N=1): VPU multiply + sublane reduce instead of an N=1 MXU matmul;
    # keeps the output store lane-dense (1, TB).
    z = jnp.sum(h1 * w2_ref[...], axis=0, keepdims=True) + b2_ref[...]
    o_ref[...] = jax.nn.sigmoid(z)


def _round_up(n, m):
    return ((n + m - 1) // m) * m


@functools.partial(jax.jit, static_argnames=("block_batch_max",))
def mlp_forward(x, w0, b0, w1, b1, w2, b2, *, block_batch_max=4096):
    """x: (B, F) f32, w*: (in, out) f32, b*: (1, out) f32  ->  (B, 1) f32."""
    B, F = x.shape
    H0 = w0.shape[1]
    H1 = w1.shape[1]

    # Adaptive batch tile: >=128 (lane-dense output), <=TB_MAX, and ~ceil(B/2) so any
    # batch above 128 rows gets at least 2 grid tiles (keeps both v7x cores busy).
    TB = max(128, min(block_batch_max, _round_up(-(-B // 2), 128)))
    num_tiles = pl.cdiv(B, TB)
    B_pad = num_tiles * TB

    # Single cheap pad; no transpose / dtype-cast pre-pass over x.
    x_p = jnp.pad(x, ((0, B_pad - B), (0, 0)))                       # (B_pad, F)
    w0_t = w0.T                                                      # (H0, F)
    w1_t = w1.T                                                      # (H1, H0)
    b0_c = b0.reshape(H0, 1)
    b1_c = b1.reshape(H1, 1)
    w2_c = w2.reshape(H1, 1)
    b2_c = b2.reshape(1, 1)

    flops = 2 * B_pad * (F * H0 + H0 * H1 + H1)
    bytes_accessed = 4 * (x_p.size + w0_t.size + w1_t.size + b0_c.size
                          + b1_c.size + w2_c.size + b2_c.size + B_pad)

    out = pl.pallas_call(
        mlp_kernel,
        out_shape=jax.ShapeDtypeStruct((1, B_pad), jnp.float32),
        grid=(num_tiles,),
        in_specs=[
            pl.BlockSpec((TB, F), lambda i: (i, 0)),      # x tile (pipelined)
            pl.BlockSpec((H0, F), lambda i: (0, 0)),      # weights: VMEM-resident
            pl.BlockSpec((H0, 1), lambda i: (0, 0)),
            pl.BlockSpec((H1, H0), lambda i: (0, 0)),
            pl.BlockSpec((H1, 1), lambda i: (0, 0)),
            pl.BlockSpec((H1, 1), lambda i: (0, 0)),
            pl.BlockSpec((1, 1), lambda i: (0, 0)),
        ],
        out_specs=pl.BlockSpec((1, TB), lambda i: (0, i)),
        compiler_params=pltpu.CompilerParams(
            dimension_semantics=("parallel",)),
        cost_estimate=pl.CostEstimate(
            flops=flops, transcendentals=B_pad, bytes_accessed=bytes_accessed),
    )(x_p, w0_t, b0_c, w1_t, b1_c, w2_c, b2_c)

    # Back to PyTorch-style (B, 1) output, dropping batch padding.
    return out[0, :B].reshape(B, 1)


def init_linear(key, fan_in, fan_out):
    # Deterministic init mimicking PyTorch's default uniform(-1/sqrt(fan_in), 1/sqrt(fan_in)).
    kw, kb = jax.random.split(key)
    bound = 1.0 / jnp.sqrt(jnp.float32(fan_in))
    w = jax.random.uniform(kw, (fan_in, fan_out), jnp.float32, -bound, bound)
    b = jax.random.uniform(kb, (1, fan_out), jnp.float32, -bound, bound)
    return w, b


if __name__ == "__main__":
    num_feature = 32
    num_neuron = [128, 32]
    batch = 8

    key = jax.random.PRNGKey(0)
    kx, k0, k1, k2 = jax.random.split(key, 4)

    x = jax.random.normal(kx, (batch, num_feature), jnp.float32)
    w0, b0 = init_linear(k0, num_feature, num_neuron[0])      # fc0: 32 -> 128
    w1, b1 = init_linear(k1, num_neuron[0], num_neuron[1])    # fc1: 128 -> 32
    w2, b2 = init_linear(k2, num_neuron[1], 1)                # out: 32 -> 1

    y = mlp_forward(x, w0, b0, w1, b1, w2, b2)
    jax.block_until_ready(y)

    # Pure-f32 reference (kernel is f32 throughout).
    h0 = jnp.maximum(x @ w0 + b0, 0.0)
    h1 = jnp.maximum(h0 @ w1 + b1, 0.0)
    y_ref = jax.nn.sigmoid(h1 @ w2 + b2)

    assert y.shape == (batch, 1)
    assert jnp.allclose(y, y_ref, atol=2e-3), "mismatch vs reference"

    print("KERNEL_OK")
</pallas_src>

<mosaic_0001>
module attributes {stable_mosaic.version = 11 : i64} {
  func.func @mlp_kernel(%arg0: i32, %arg1: memref<128x32xf32, #tpu.memory_space<vmem>>, %arg2: memref<128x32xf32, #tpu.memory_space<vmem>>, %arg3: memref<128x1xf32, #tpu.memory_space<vmem>>, %arg4: memref<32x128xf32, #tpu.memory_space<vmem>>, %arg5: memref<32x1xf32, #tpu.memory_space<vmem>>, %arg6: memref<32x1xf32, #tpu.memory_space<vmem>>, %arg7: memref<1x1xf32, #tpu.memory_space<vmem>>, %arg8: memref<1x128xf32, #tpu.memory_space<vmem>>) attributes {dimension_semantics = [#tpu.dimension_semantics<parallel>], iteration_bounds = array<i64: 1>, scalar_prefetch = 0 : i64, scratch_operands = 0 : i64, tpu.core_type = #tpu.core_type<tc>, window_params = [{transform_indices = @transform_0, window_bounds = array<i64: 128, 32>}, {pipeline_mode = #tpu.pipeline_mode<synchronous>, transform_indices = @transform_1, window_bounds = array<i64: 128, 32>}, {pipeline_mode = #tpu.pipeline_mode<synchronous>, transform_indices = @transform_2, window_bounds = array<i64: 128, 1>}, {pipeline_mode = #tpu.pipeline_mode<synchronous>, transform_indices = @transform_3, window_bounds = array<i64: 32, 128>}, {pipeline_mode = #tpu.pipeline_mode<synchronous>, transform_indices = @transform_4, window_bounds = array<i64: 32, 1>}, {pipeline_mode = #tpu.pipeline_mode<synchronous>, transform_indices = @transform_5, window_bounds = array<i64: 32, 1>}, {pipeline_mode = #tpu.pipeline_mode<synchronous>, transform_indices = @transform_6, window_bounds = array<i64: 1, 1>}, {transform_indices = @transform_7, window_bounds = array<i64: 1, 128>}]} {
    %c0 = arith.constant 0 : index
    %c0_0 = arith.constant 0 : index
    %0 = vector.load %arg2[%c0, %c0_0] : memref<128x32xf32, #tpu.memory_space<vmem>>, vector<128x32xf32>
    %c0_1 = arith.constant 0 : index
    %c0_2 = arith.constant 0 : index
    %1 = vector.load %arg1[%c0_1, %c0_2] : memref<128x32xf32, #tpu.memory_space<vmem>>, vector<128x32xf32>
    %cst = arith.constant dense<0.000000e+00> : vector<128x128xf32>
    %2 = tpu.matmul %0, %1, %cst {dimension_numbers = #tpu.dot_dimension_numbers<[1], [1], [0], [0], [0, 0, 1, 0], [], []>} : vector<128x32xf32>, vector<128x32xf32>, vector<128x128xf32> -> vector<128x128xf32>
    %c0_3 = arith.constant 0 : index
    %c0_4 = arith.constant 0 : index
    %3 = vector.load %arg3[%c0_3, %c0_4] : memref<128x1xf32, #tpu.memory_space<vmem>>, vector<128x1xf32>
    %4 = vector.broadcast %3 : vector<128x1xf32> to vector<128x128xf32>
    %5 = arith.addf %2, %4 : vector<128x128xf32>
    %cst_5 = arith.constant 0.000000e+00 : f32
    %6 = vector.broadcast %cst_5 : f32 to vector<128x128xf32>
    %7 = arith.maximumf %5, %6 : vector<128x128xf32>
    %c0_6 = arith.constant 0 : index
    %c0_7 = arith.constant 0 : index
    %8 = vector.load %arg4[%c0_6, %c0_7] : memref<32x128xf32, #tpu.memory_space<vmem>>, vector<32x128xf32>
    %cst_8 = arith.constant dense<0.000000e+00> : vector<32x128xf32>
    %9 = tpu.matmul %8, %7, %cst_8 {dimension_numbers = #tpu.dot_dimension_numbers<[1], [0], [0], [1], [0, 0, 1, 1], [], []>} : vector<32x128xf32>, vector<128x128xf32>, vector<32x128xf32> -> vector<32x128xf32>
    %c0_9 = arith.constant 0 : index
    %c0_10 = arith.constant 0 : index
    %10 = vector.load %arg5[%c0_9, %c0_10] : memref<32x1xf32, #tpu.memory_space<vmem>>, vector<32x1xf32>
    %11 = vector.broadcast %10 : vector<32x1xf32> to vector<32x128xf32>
    %12 = arith.addf %9, %11 : vector<32x128xf32>
    %cst_11 = arith.constant 0.000000e+00 : f32
    %13 = vector.broadcast %cst_11 : f32 to vector<32x128xf32>
    %14 = arith.maximumf %12, %13 : vector<32x128xf32>
    %c0_12 = arith.constant 0 : index
    %c0_13 = arith.constant 0 : index
    %15 = vector.load %arg6[%c0_12, %c0_13] : memref<32x1xf32, #tpu.memory_space<vmem>>, vector<32x1xf32>
    %16 = vector.broadcast %15 : vector<32x1xf32> to vector<32x128xf32>
    %17 = arith.mulf %14, %16 : vector<32x128xf32>
    %cst_14 = arith.constant dense<0.000000e+00> : vector<128xf32>
    %18 = vector.multi_reduction <add>, %17, %cst_14 [0] : vector<32x128xf32> to vector<128xf32>
    %19 = vector.shape_cast %18 : vector<128xf32> to vector<1x128xf32>
    %c0_15 = arith.constant 0 : index
    %c0_16 = arith.constant 0 : index
    %20 = vector.load %arg7[%c0_15, %c0_16] : memref<1x1xf32, #tpu.memory_space<vmem>>, vector<1x1xf32>
    %21 = vector.broadcast %20 : vector<1x1xf32> to vector<1x128xf32>
    %22 = arith.addf %19, %21 : vector<1x128xf32>
    %23 = arith.negf %22 : vector<1x128xf32>
    %24 = math.exp %23 : vector<1x128xf32>
    %cst_17 = arith.constant 1.000000e+00 : f32
    %25 = vector.broadcast %cst_17 : f32 to vector<1x128xf32>
    %26 = arith.addf %25, %24 : vector<1x128xf32>
    %27 = arith.divf %25, %26 : vector<1x128xf32>
    %c0_18 = arith.constant 0 : index
    %c0_19 = arith.constant 0 : index
    %28 = vector.load %arg8[%c0_18, %c0_19] : memref<1x128xf32, #tpu.memory_space<vmem>>, vector<1x128xf32>
    tpu.vector_store %arg8[%c0_18, %c0_19], %27 {strides = array<i32>} : memref<1x128xf32, #tpu.memory_space<vmem>>, vector<1x128xf32>,
    return
  }
  func.func @transform_0(%arg0: i32) -> (i32, i32) {
    %c0_i32 = arith.constant 0 : i32
    %c0_i32_0 = arith.constant 0 : i32
    return %arg0, %c0_i32 : i32, i32
  }
  func.func @transform_1(%arg0: i32) -> (i32, i32) {
    %c0_i32 = arith.constant 0 : i32
    %c0_i32_0 = arith.constant 0 : i32
    %c0_i32_1 = arith.constant 0 : i32
    return %c0_i32, %c0_i32_0 : i32, i32
  }
  func.func @transform_2(%arg0: i32) -> (i32, i32) {
    %c0_i32 = arith.constant 0 : i32
    %c0_i32_0 = arith.constant 0 : i32
    %c0_i32_1 = arith.constant 0 : i32
    return %c0_i32, %c0_i32_0 : i32, i32
  }
  func.func @transform_3(%arg0: i32) -> (i32, i32) {
    %c0_i32 = arith.constant 0 : i32
    %c0_i32_0 = arith.constant 0 : i32
    %c0_i32_1 = arith.constant 0 : i32
    return %c0_i32, %c0_i32_0 : i32, i32
  }
  func.func @transform_4(%arg0: i32) -> (i32, i32) {
    %c0_i32 = arith.constant 0 : i32
    %c0_i32_0 = arith.constant 0 : i32
    %c0_i32_1 = arith.constant 0 : i32
    return %c0_i32, %c0_i32_0 : i32, i32
  }
  func.func @transform_5(%arg0: i32) -> (i32, i32) {
    %c0_i32 = arith.constant 0 : i32
    %c0_i32_0 = arith.constant 0 : i32
    %c0_i32_1 = arith.constant 0 : i32
    return %c0_i32, %c0_i32_0 : i32, i32
  }
  func.func @transform_6(%arg0: i32) -> (i32, i32) {
    %c0_i32 = arith.constant 0 : i32
    %c0_i32_0 = arith.constant 0 : i32
    %c0_i32_1 = arith.constant 0 : i32
    return %c0_i32, %c0_i32_0 : i32, i32
  }
  func.func @transform_7(%arg0: i32) -> (i32, i32) {
    %c0_i32 = arith.constant 0 : i32
    %c0_i32_0 = arith.constant 0 : i32
    return %c0_i32, %arg0 : i32, i32
  }
}

</mosaic_0001>

<llo_original>
// kernel: mlp_forward.1
$region0: #{mlp_forward.1}
  #allocation0 [shape = 'u32[]', space=smem, size = 0x4, offset = 0x4, fixed_abs, tag = 'smem constant byte address 0x4 - core index']
  #allocation1 [shape = 'u32[144,128]{1,0:T(1,128)}', space=vmem, size = 0x12000, scoped, tag = 'internal scratch']
  #allocation2 [shape = 'f32[1,1]{1,0:T(1,128)S(1)}', space=vmem, size = 0x200, scoped, tag = 'scoped memory for mlp_forward.1']
  %s0 = inlined_call_operand.vmem [shape: f32[128,32], index: 0, kind: input, shape index: {}]
  %s1 = inlined_call_operand.vmem [shape: f32[128,32], index: 1, kind: input, shape index: {}]
  %s2 = inlined_call_operand.vmem [shape: f32[128,1], index: 2, kind: input, shape index: {}]
  %s3 = inlined_call_operand.vmem [shape: f32[32,128], index: 3, kind: input, shape index: {}]
  %s4 = inlined_call_operand.vmem [shape: f32[32,1], index: 4, kind: input, shape index: {}]
  %s5 = inlined_call_operand.vmem [shape: f32[32,1], index: 5, kind: input, shape index: {}]
  %s6 = inlined_call_operand.<no memory space> [shape: f32[1,1], index: 6, kind: input, shape index: {}]
  %s7 = inlined_call_operand.vmem [shape: f32[1,128], index: 7, kind: output, shape index: {}]
  %s8 = sld [smem:[#allocation0]]
  $region38: #{mlp_forward.1} parent=0
    _
  %s10 = ssub.s32 1, %s8
  %s11 = scalar_select 0, %s10, %s8
  %v12 = vstv %s6
  %13 = vst [vmem:[#allocation2] sm:$0x1] %v12
  // Predicated region
  $region2: #{mlp_forward.1} parent=0 // pred_check
    _
  $region3: #{mlp_forward.1} parent=0 // pred_check_branch
    %15 = sbr.rel (0) target = $region5
  $region4: #{mlp_forward.1} parent=0 // pred_region
    _
  $region5: #{mlp_forward.1} parent=0 // pred_fallthru
    _
  // Predicated region
  $region6: #{mlp_forward.1} parent=0 // pred_check
    _
  $region7: #{mlp_forward.1} parent=0 // pred_check_branch
    %17 = sbr.rel (0) target = $region9
  $region8: #{mlp_forward.1} parent=0 // pred_region
    _
  $region9: #{mlp_forward.1} parent=0 // pred_fallthru
    _
  // Predicated region
  $region10: #{mlp_forward.1} parent=0 // pred_check
    _
  $region11: #{mlp_forward.1} parent=0 // pred_check_branch
    %19 = sbr.rel (0) target = $region13
  $region12: #{mlp_forward.1} parent=0 // pred_region
    _
  $region13: #{mlp_forward.1} parent=0 // pred_fallthru
    _
  // Predicated region
  $region14: #{mlp_forward.1} parent=0 // pred_check
    _
  $region15: #{mlp_forward.1} parent=0 // pred_check_branch
    %21 = sbr.rel (0) target = $region17
  $region16: #{mlp_forward.1} parent=0 // pred_region
    _
  $region17: #{mlp_forward.1} parent=0 // pred_fallthru
    _
  // Predicated region
  $region18: #{mlp_forward.1} parent=0 // pred_check
    _
  $region19: #{mlp_forward.1} parent=0 // pred_check_branch
    %23 = sbr.rel (0) target = $region21
  $region20: #{mlp_forward.1} parent=0 // pred_region
    _
  $region21: #{mlp_forward.1} parent=0 // pred_fallthru
    _
  // Predicated region
  $region22: #{mlp_forward.1} parent=0 // pred_check
    _
  $region23: #{mlp_forward.1} parent=0 // pred_check_branch
    %25 = sbr.rel (0) target = $region25
  $region24: #{mlp_forward.1} parent=0 // pred_region
    _
  $region25: #{mlp_forward.1} parent=0 // pred_fallthru
    _
  // Predicated region
  $region26: #{mlp_forward.1} parent=0 // pred_check
    _
  $region27: #{mlp_forward.1} parent=0 // pred_check_branch
    %27 = sbr.rel (0) target = $region29
  $region28: #{mlp_forward.1} parent=0 // pred_region
    _
  $region29: #{mlp_forward.1} parent=0 // pred_fallthru
    _
  %v28 = vld [vmem:[%s1] sm:$0xff]
  %v29 = vld [vmem:[%s1 + $0x8] sm:$0xff]
  %v30 = vld [vmem:[%s1 + $0x10] sm:$0xff]
  %v31 = vld [vmem:[%s1 + $0x18] sm:$0xff]
  %v32 = vld [vmem:[%s1 + $0x20] sm:$0xff]
  %v33 = vld [vmem:[%s1 + $0x28] sm:$0xff]
  %v34 = vld [vmem:[%s1 + $0x30] sm:$0xff]
  %v35 = vld [vmem:[%s1 + $0x38] sm:$0xff]
  %v36 = vld [vmem:[%s1 + $0x40] sm:$0xff]
  %v37 = vld [vmem:[%s1 + $0x48] sm:$0xff]
  %v38 = vld [vmem:[%s1 + $0x50] sm:$0xff]
  %v39 = vld [vmem:[%s1 + $0x58] sm:$0xff]
  %v40 = vld [vmem:[%s1 + $0x60] sm:$0xff]
  %v41 = vld [vmem:[%s1 + $0x68] sm:$0xff]
  %v42 = vld [vmem:[%s1 + $0x70] sm:$0xff]
  %v43 = vld [vmem:[%s1 + $0x78] sm:$0xff]
  %v44 = vld [vmem:[%s0] sm:$0xff]
  %v45 = vld [vmem:[%s0 + $0x8] sm:$0xff]
  %v46 = vld [vmem:[%s0 + $0x10] sm:$0xff]
  %v47 = vld [vmem:[%s0 + $0x18] sm:$0xff]
  %v48 = vld [vmem:[%s0 + $0x20] sm:$0xff]
  %v49 = vld [vmem:[%s0 + $0x28] sm:$0xff]
  %v50 = vld [vmem:[%s0 + $0x30] sm:$0xff]
  %v51 = vld [vmem:[%s0 + $0x38] sm:$0xff]
  %v52 = vld [vmem:[%s0 + $0x40] sm:$0xff]
  %v53 = vld [vmem:[%s0 + $0x48] sm:$0xff]
  %v54 = vld [vmem:[%s0 + $0x50] sm:$0xff]
  %v55 = vld [vmem:[%s0 + $0x58] sm:$0xff]
  %v56 = vld [vmem:[%s0 + $0x60] sm:$0xff]
  %v57 = vld [vmem:[%s0 + $0x68] sm:$0xff]
  %v58 = vld [vmem:[%s0 + $0x70] sm:$0xff]
  %v59 = vld [vmem:[%s0 + $0x78] sm:$0xff]
  %v60 = vld [vmem:[%s2] sm:$0xff]
  %v61 = vld [vmem:[%s2 + $0x8] sm:$0xff]
  %v62 = vld [vmem:[%s2 + $0x10] sm:$0xff]
  %v63 = vld [vmem:[%s2 + $0x18] sm:$0xff]
  %v64 = vld [vmem:[%s2 + $0x20] sm:$0xff]
  %v65 = vld [vmem:[%s2 + $0x28] sm:$0xff]
  %v66 = vld [vmem:[%s2 + $0x30] sm:$0xff]
  %v67 = vld [vmem:[%s2 + $0x38] sm:$0xff]
  %v68 = vld [vmem:[%s2 + $0x40] sm:$0xff]
  %v69 = vld [vmem:[%s2 + $0x48] sm:$0xff]
  %v70 = vld [vmem:[%s2 + $0x50] sm:$0xff]
  %v71 = vld [vmem:[%s2 + $0x58] sm:$0xff]
  %v72 = vld [vmem:[%s2 + $0x60] sm:$0xff]
  %v73 = vld [vmem:[%s2 + $0x68] sm:$0xff]
  %v74 = vld [vmem:[%s2 + $0x70] sm:$0xff]
  %v75 = vld [vmem:[%s2 + $0x78] sm:$0xff]
  %77 = vset.pattern.permute.xlu0 0
  %78 = vperm.xlu0 %77, %v60
  %v79 = vpop.permute.xlu0 %78
  %82 = vset.pattern.permute.xlu0 0
  %83 = vperm.xlu0 %82, %v61
  %v84 = vpop.permute.xlu0 %83
  %87 = vset.pattern.permute.xlu0 0
  %88 = vperm.xlu0 %87, %v62
  %v89 = vpop.permute.xlu0 %88
  %92 = vset.pattern.permute.xlu0 0
  %93 = vperm.xlu0 %92, %v63
  %v94 = vpop.permute.xlu0 %93
  %97 = vset.pattern.permute.xlu0 0
  %98 = vperm.xlu0 %97, %v64
  %v99 = vpop.permute.xlu0 %98
  %102 = vset.pattern.permute.xlu0 0
  %103 = vperm.xlu0 %102, %v65
  %v104 = vpop.permute.xlu0 %103
  %107 = vset.pattern.permute.xlu0 0
  %108 = vperm.xlu0 %107, %v66
  %v109 = vpop.permute.xlu0 %108
  %112 = vset.pattern.permute.xlu0 0
  %113 = vperm.xlu0 %112, %v67
  %v114 = vpop.permute.xlu0 %113
  %117 = vset.pattern.permute.xlu0 0
  %118 = vperm.xlu0 %117, %v68
  %v119 = vpop.permute.xlu0 %118
  %122 = vset.pattern.permute.xlu0 0
  %123 = vperm.xlu0 %122, %v69
  %v124 = vpop.permute.xlu0 %123
  %127 = vset.pattern.permute.xlu0 0
  %128 = vperm.xlu0 %127, %v70
  %v129 = vpop.permute.xlu0 %128
  %132 = vset.pattern.permute.xlu0 0
  %133 = vperm.xlu0 %132, %v71
  %v134 = vpop.permute.xlu0 %133
  %137 = vset.pattern.permute.xlu0 0
  %138 = vperm.xlu0 %137, %v72
  %v139 = vpop.permute.xlu0 %138
  %142 = vset.pattern.permute.xlu0 0
  %143 = vperm.xlu0 %142, %v73
  %v144 = vpop.permute.xlu0 %143
  %147 = vset.pattern.permute.xlu0 0
  %148 = vperm.xlu0 %147, %v74
  %v149 = vpop.permute.xlu0 %148
  %152 = vset.pattern.permute.xlu0 0
  %153 = vperm.xlu0 %152, %v75
  %v154 = vpop.permute.xlu0 %153
  %vm156 = vcmask 261120
  %v158 = vsel %vm156, %v28, 0
  %v161 = vsel %vm156, %v29, 0
  %v164 = vsel %vm156, %v30, 0
  %v167 = vsel %vm156, %v31, 0
  %v170 = vsel %vm156, %v32, 0
  %v173 = vsel %vm156, %v33, 0
  %v176 = vsel %vm156, %v34, 0
  %v179 = vsel %vm156, %v35, 0
  %v182 = vsel %vm156, %v36, 0
  %v185 = vsel %vm156, %v37, 0
  %v188 = vsel %vm156, %v38, 0
  %v191 = vsel %vm156, %v39, 0
  %v194 = vsel %vm156, %v40, 0
  %v197 = vsel %vm156, %v41, 0
  %v200 = vsel %vm156, %v42, 0
  %v203 = vsel %vm156, %v43, 0
  %v206 = vsel %vm156, %v44, 0
  %v209 = vsel %vm156, %v45, 0
  %v212 = vsel %vm156, %v46, 0
  %v215 = vsel %vm156, %v47, 0
  %v218 = vsel %vm156, %v48, 0
  %v221 = vsel %vm156, %v49, 0
  %v224 = vsel %vm156, %v50, 0
  %v227 = vsel %vm156, %v51, 0
  %v230 = vsel %vm156, %v52, 0
  %v233 = vsel %vm156, %v53, 0
  %v236 = vsel %vm156, %v54, 0
  %v239 = vsel %vm156, %v55, 0
  %v242 = vsel %vm156, %v56, 0
  %v245 = vsel %vm156, %v57, 0
  %v248 = vsel %vm156, %v58, 0
  %v251 = vsel %vm156, %v59, 0
  %253 = vmatprep.subr.mxu0 0.0
  %254 = vmatpush1.xpose.msra.mxu0 %v251
  %255 = vmatprep.subr.mxu0 0.0
  %256 = vmatpush1.xpose.msra.mxu0 %v248
  %257 = vmatprep.subr.mxu0 0.0
  %258 = vmatpush1.xpose.msra.mxu0 %v245
  %259 = vmatprep.subr.mxu0 0.0
  %260 = vmatpush1.xpose.msra.mxu0 %v242
  %261 = vmatprep.subr.mxu0 0.0
  %262 = vmatpush1.xpose.msra.mxu0 %v239
  %263 = vmatprep.subr.mxu0 0.0
  %264 = vmatpush1.xpose.msra.mxu0 %v236
  %265 = vmatprep.subr.mxu0 0.0
  %266 = vmatpush1.xpose.msra.mxu0 %v233
  %267 = vmatprep.subr.mxu0 0.0
  %268 = vmatpush1.xpose.msra.mxu0 %v230
  %269 = vmatprep.subr.mxu0 0.0
  %270 = vmatpush1.xpose.msra.mxu0 %v227
  %271 = vmatprep.subr.mxu0 0.0
  %272 = vmatpush1.xpose.msra.mxu0 %v224
  %273 = vmatprep.subr.mxu0 0.0
  %274 = vmatpush1.xpose.msra.mxu0 %v221
  %275 = vmatprep.subr.mxu0 0.0
  %276 = vmatpush1.xpose.msra.mxu0 %v218
  %277 = vmatprep.subr.mxu0 0.0
  %278 = vmatpush1.xpose.msra.mxu0 %v215
  %279 = vmatprep.subr.mxu0 0.0
  %280 = vmatpush1.xpose.msra.mxu0 %v212
  %281 = vmatprep.subr.mxu0 0.0
  %282 = vmatpush1.xpose.msra.mxu0 %v209
  %283 = vmatprep.subr.mxu0 0.0
  %284 = vmatpush1.xpose.msra.mxu0 %v206
  %285 = vmatprep.subr.mxu0 0.0
  %286 = vmatpush2.xpose.msra.mxu0 0.0
  %287 = vmatprep.subr.mxu0 0.0
  %288 = vmatpush2.xpose.msra.mxu0 0.0
  %289 = vmatprep.subr.mxu0 0.0
  %290 = vmatpush2.xpose.msra.mxu0 0.0
  %291 = vmatprep.subr.mxu0 0.0
  %292 = vmatpush2.xpose.msra.mxu0 0.0
  %293 = vmatprep.subr.mxu0 0.0
  %294 = vmatpush2.xpose.msra.mxu0 0.0
  %295 = vmatprep.subr.mxu0 0.0
  %296 = vmatpush2.xpose.msra.mxu0 0.0
  %297 = vmatprep.subr.mxu0 0.0
  %298 = vmatpush2.xpose.msra.mxu0 0.0
  %299 = vmatprep.subr.mxu0 0.0
  %300 = vmatpush2.xpose.msra.mxu0 0.0
  %301 = vmatprep.subr.mxu0 0.0
  %302 = vmatpush2.xpose.msra.mxu0 0.0
  %303 = vmatprep.subr.mxu0 0.0
  %304 = vmatpush2.xpose.msra.mxu0 0.0
  %305 = vmatprep.subr.mxu0 0.0
  %306 = vmatpush2.xpose.msra.mxu0 0.0
  %307 = vmatprep.subr.mxu0 0.0
  %308 = vmatpush2.xpose.msra.mxu0 0.0
  %309 = vmatprep.subr.mxu0 0.0
  %310 = vmatpush2.xpose.msra.mxu0 0.0
  %311 = vmatprep.subr.mxu0 0.0
  %312 = vmatpush2.xpose.msra.mxu0 0.0
  %313 = vmatprep.subr.mxu0 0.0
  %314 = vmatpush2.xpose.msra.mxu0 0.0
  %315 = vmatprep.subr.mxu0 0.0
  %316 = vmatpush2.xpose.msra.mxu0 0.0
  %317 = vmatprep.mubr.f32.mxu0 0.0
  %318 = vmatmul.mubr.f32.gmra.mxu0 %v158
  %v319 = vpop.f32.mrf.mxu0
  %v320 = vadd.f32 %v79, %v319
  %v321 = vpop.f32.mrf.mxu0
  %322 = vmatprep.mubr.f32.mxu0 0.0
  %323 = vmatmul.mubr.f32.gmra.mxu0 %v161
  %v324 = vpop.f32.mrf.mxu0
  %v325 = vadd.f32 %v84, %v324
  %v326 = vpop.f32.mrf.mxu0
  %327 = vmatprep.mubr.f32.mxu0 0.0
  %328 = vmatmul.mubr.f32.gmra.mxu0 %v164
  %v329 = vpop.f32.mrf.mxu0
  %v330 = vadd.f32 %v89, %v329
  %v331 = vpop.f32.mrf.mxu0
  %332 = vmatprep.mubr.f32.mxu0 0.0
  %333 = vmatmul.mubr.f32.gmra.mxu0 %v167
  %v334 = vpop.f32.mrf.mxu0
  %v335 = vadd.f32 %v94, %v334
  %v336 = vpop.f32.mrf.mxu0
  %337 = vmatprep.mubr.f32.mxu0 0.0
  %338 = vmatmul.mubr.f32.gmra.mxu0 %v170
  %v339 = vpop.f32.mrf.mxu0
  %v340 = vadd.f32 %v99, %v339
  %v341 = vpop.f32.mrf.mxu0
  %342 = vmatprep.mubr.f32.mxu0 0.0
  %343 = vmatmul.mubr.f32.gmra.mxu0 %v173
  %v344 = vpop.f32.mrf.mxu0
  %v345 = vadd.f32 %v104, %v344
  %v346 = vpop.f32.mrf.mxu0
  %347 = vmatprep.mubr.f32.mxu0 0.0
  %348 = vmatmul.mubr.f32.gmra.mxu0 %v176
  %v349 = vpop.f32.mrf.mxu0
  %v350 = vadd.f32 %v109, %v349
  %v351 = vpop.f32.mrf.mxu0
  %352 = vmatprep.mubr.f32.mxu0 0.0
  %353 = vmatmul.mubr.f32.gmra.mxu0 %v179
  %v354 = vpop.f32.mrf.mxu0
  %v355 = vadd.f32 %v114, %v354
  %v356 = vpop.f32.mrf.mxu0
  %357 = vmatprep.mubr.f32.mxu0 0.0
  %358 = vmatmul.mubr.f32.gmra.mxu0 %v182
  %v359 = vpop.f32.mrf.mxu0
  %v360 = vadd.f32 %v119, %v359
  %v361 = vpop.f32.mrf.mxu0
  %362 = vmatprep.mubr.f32.mxu0 0.0
  %363 = vmatmul.mubr.f32.gmra.mxu0 %v185
  %v364 = vpop.f32.mrf.mxu0
  %v365 = vadd.f32 %v124, %v364
  %v366 = vpop.f32.mrf.mxu0
  %367 = vmatprep.mubr.f32.mxu0 0.0
  %368 = vmatmul.mubr.f32.gmra.mxu0 %v188
  %v369 = vpop.f32.mrf.mxu0
  %v370 = vadd.f32 %v129, %v369
  %v371 = vpop.f32.mrf.mxu0
  %372 = vmatprep.mubr.f32.mxu0 0.0
  %373 = vmatmul.mubr.f32.gmra.mxu0 %v191
  %v374 = vpop.f32.mrf.mxu0
  %v375 = vadd.f32 %v134, %v374
  %v376 = vpop.f32.mrf.mxu0
  %377 = vmatprep.mubr.f32.mxu0 0.0
  %378 = vmatmul.mubr.f32.gmra.mxu0 %v194
  %v379 = vpop.f32.mrf.mxu0
  %v380 = vadd.f32 %v139, %v379
  %v381 = vpop.f32.mrf.mxu0
  %382 = vmatprep.mubr.f32.mxu0 0.0
  %383 = vmatmul.mubr.f32.gmra.mxu0 %v197
  %v384 = vpop.f32.mrf.mxu0
  %v385 = vadd.f32 %v144, %v384
  %v386 = vpop.f32.mrf.mxu0
  %387 = vmatprep.mubr.f32.mxu0 0.0
  %388 = vmatmul.mubr.f32.gmra.mxu0 %v200
  %v389 = vpop.f32.mrf.mxu0
  %v390 = vadd.f32 %v149, %v389
  %v391 = vpop.f32.mrf.mxu0
  %392 = vmatprep.mubr.f32.mxu0 0.0
  %393 = vmatmul.mubr.f32.gmra.mxu0 %v203
  %v394 = vpop.f32.mrf.mxu0
  %v395 = vadd.f32 %v154, %v394
  %v396 = vpop.f32.mrf.mxu0
  %397 = vdwg.mxu0
  %v398 = vmax.f32 %v320, 0.0
  %v399 = vmax.f32 %v325, 0.0
  %v400 = vmax.f32 %v330, 0.0
  %v401 = vmax.f32 %v335, 0.0
  %v402 = vmax.f32 %v340, 0.0
  %v403 = vmax.f32 %v345, 0.0
  %v404 = vmax.f32 %v350, 0.0
  %v405 = vmax.f32 %v355, 0.0
  %v406 = vmax.f32 %v360, 0.0
  %v407 = vmax.f32 %v365, 0.0
  %v408 = vmax.f32 %v370, 0.0
  %v409 = vmax.f32 %v375, 0.0
  %v410 = vmax.f32 %v380, 0.0
  %v411 = vmax.f32 %v385, 0.0
  %v412 = vmax.f32 %v390, 0.0
  %v413 = vmax.f32 %v395, 0.0
  %v414 = vld [vmem:[%s3] sm:$0xff]
  %v415 = vld [vmem:[%s3 + $0x8] sm:$0xff]
  %v416 = vld [vmem:[%s3 + $0x10] sm:$0xff]
  %v417 = vld [vmem:[%s3 + $0x18] sm:$0xff]
  %v418 = vld [vmem:[%s4] sm:$0xff]
  %v419 = vld [vmem:[%s4 + $0x8] sm:$0xff]
  %v420 = vld [vmem:[%s4 + $0x10] sm:$0xff]
  %v421 = vld [vmem:[%s4 + $0x18] sm:$0xff]
  %423 = vset.pattern.permute.xlu0 0
  %424 = vperm.xlu0 %423, %v418
  %v425 = vpop.permute.xlu0 %424
  %428 = vset.pattern.permute.xlu0 0
  %429 = vperm.xlu0 %428, %v419
  %v430 = vpop.permute.xlu0 %429
  %433 = vset.pattern.permute.xlu0 0
  %434 = vperm.xlu0 %433, %v420
  %v435 = vpop.permute.xlu0 %434
  %438 = vset.pattern.permute.xlu0 0
  %439 = vperm.xlu0 %438, %v421
  %v440 = vpop.permute.xlu0 %439
  %442 = vmatprep.subr.mxu0 0.0
  %443 = vmatpush1.msra.mxu0 %v413
  %444 = vmatprep.subr.mxu0 0.0
  %445 = vmatpush1.msra.mxu0 %v412
  %446 = vmatprep.subr.mxu0 0.0
  %447 = vmatpush1.msra.mxu0 %v411
  %448 = vmatprep.subr.mxu0 0.0
  %449 = vmatpush1.msra.mxu0 %v410
  %450 = vmatprep.subr.mxu0 0.0
  %451 = vmatpush1.msra.mxu0 %v409
  %452 = vmatprep.subr.mxu0 0.0
  %453 = vmatpush1.msra.mxu0 %v408
  %454 = vmatprep.subr.mxu0 0.0
  %455 = vmatpush1.msra.mxu0 %v407
  %456 = vmatprep.subr.mxu0 0.0
  %457 = vmatpush1.msra.mxu0 %v406
  %458 = vmatprep.subr.mxu0 0.0
  %459 = vmatpush1.msra.mxu0 %v405
  %460 = vmatprep.subr.mxu0 0.0
  %461 = vmatpush1.msra.mxu0 %v404
  %462 = vmatprep.subr.mxu0 0.0
  %463 = vmatpush1.msra.mxu0 %v403
  %464 = vmatprep.subr.mxu0 0.0
  %465 = vmatpush1.msra.mxu0 %v402
  %466 = vmatprep.subr.mxu0 0.0
  %467 = vmatpush1.msra.mxu0 %v401
  %468 = vmatprep.subr.mxu0 0.0
  %469 = vmatpush1.msra.mxu0 %v400
  %470 = vmatprep.subr.mxu0 0.0
  %471 = vmatpush1.msra.mxu0 %v399
  %472 = vmatprep.subr.mxu0 0.0
  %473 = vmatpush1.msra.mxu0 %v398
  %474 = vmatprep.subr.mxu0 0.0
  %475 = vmatpush2.msra.mxu0 0.0
  %476 = vmatprep.subr.mxu0 0.0
  %477 = vmatpush2.msra.mxu0 0.0
  %478 = vmatprep.subr.mxu0 0.0
  %479 = vmatpush2.msra.mxu0 0.0
  %480 = vmatprep.subr.mxu0 0.0
  %481 = vmatpush2.msra.mxu0 0.0
  %482 = vmatprep.subr.mxu0 0.0
  %483 = vmatpush2.msra.mxu0 0.0
  %484 = vmatprep.subr.mxu0 0.0
  %485 = vmatpush2.msra.mxu0 0.0
  %486 = vmatprep.subr.mxu0 0.0
  %487 = vmatpush2.msra.mxu0 0.0
  %488 = vmatprep.subr.mxu0 0.0
  %489 = vmatpush2.msra.mxu0 0.0
  %490 = vmatprep.subr.mxu0 0.0
  %491 = vmatpush2.msra.mxu0 0.0
  %492 = vmatprep.subr.mxu0 0.0
  %493 = vmatpush2.msra.mxu0 0.0
  %494 = vmatprep.subr.mxu0 0.0
  %495 = vmatpush2.msra.mxu0 0.0
  %496 = vmatprep.subr.mxu0 0.0
  %497 = vmatpush2.msra.mxu0 0.0
  %498 = vmatprep.subr.mxu0 0.0
  %499 = vmatpush2.msra.mxu0 0.0
  %500 = vmatprep.subr.mxu0 0.0
  %501 = vmatpush2.msra.mxu0 0.0
  %502 = vmatprep.subr.mxu0 0.0
  %503 = vmatpush2.msra.mxu0 0.0
  %504 = vmatprep.subr.mxu0 0.0
  %505 = vmatpush2.msra.mxu0 0.0
  %506 = vmatprep.mubr.f32.mxu0 0.0
  %507 = vmatmul.mubr.f32.gmra.mxu0 %v414
  %v508 = vpop.f32.mrf.mxu0
  %v509 = vadd.f32 %v425, %v508
  %v510 = vpop.f32.mrf.mxu0
  %511 = vmatprep.mubr.f32.mxu0 0.0
  %512 = vmatmul.mubr.f32.gmra.mxu0 %v415
  %v513 = vpop.f32.mrf.mxu0
  %v514 = vadd.f32 %v430, %v513
  %v515 = vpop.f32.mrf.mxu0
  %516 = vmatprep.mubr.f32.mxu0 0.0
  %517 = vmatmul.mubr.f32.gmra.mxu0 %v416
  %v518 = vpop.f32.mrf.mxu0
  %v519 = vadd.f32 %v435, %v518
  %v520 = vpop.f32.mrf.mxu0
  %521 = vmatprep.mubr.f32.mxu0 0.0
  %522 = vmatmul.mubr.f32.gmra.mxu0 %v417
  %v523 = vpop.f32.mrf.mxu0
  %v524 = vadd.f32 %v440, %v523
  %v525 = vpop.f32.mrf.mxu0
  %526 = vdwg.mxu0
  %v527 = vmax.f32 %v509, 0.0
  %v528 = vmax.f32 %v514, 0.0
  %v529 = vmax.f32 %v519, 0.0
  %v530 = vmax.f32 %v524, 0.0
  %v531 = vld [vmem:[%s5] sm:$0xff]
  %v532 = vld [vmem:[%s5 + $0x8] sm:$0xff]
  %v533 = vld [vmem:[%s5 + $0x10] sm:$0xff]
  %v534 = vld [vmem:[%s5 + $0x18] sm:$0xff]
  %536 = vset.pattern.permute.xlu0 0
  %537 = vperm.xlu0 %536, %v531
  %v538 = vpop.permute.xlu0 %537
  %541 = vset.pattern.permute.xlu0 0
  %542 = vperm.xlu0 %541, %v532
  %v543 = vpop.permute.xlu0 %542
  %546 = vset.pattern.permute.xlu0 0
  %547 = vperm.xlu0 %546, %v533
  %v548 = vpop.permute.xlu0 %547
  %551 = vset.pattern.permute.xlu0 0
  %552 = vperm.xlu0 %551, %v534
  %v553 = vpop.permute.xlu0 %552
  %v555 = vmul.f32 %v527, %v538
  %v556 = vmul.f32 %v528, %v543
  %v557 = vmul.f32 %v529, %v548
  %v558 = vmul.f32 %v530, %v553
  %v559 = vadd.f32 %v555, %v556
  %v560 = vadd.f32 %v559, %v557
  %v561 = vadd.f32 %v560, %v558
  %v562 = vrot.slane %v561, 4
  %v563 = vadd.f32 %v561, %v562
  %v564 = vrot.slane %v563, 2
  %v565 = vadd.f32 %v563, %v564
  %v566 = vrot.slane %v565, 1
  %v567 = vadd.f32 %v565, %v566
  %v568 = vld [vmem:[#allocation2] sm:$0x1]
  %570 = vset.pattern.permute.xlu0 0
  %571 = vperm.xlu0 %570, %v568
  %v572 = vpop.permute.xlu0 %571
  %v574 = vlaneseq
  %v575 = vshrl.u32 %v574, 7
  %v576 = vsub.s32 0, %v575
  %v577 = vrot.slane %v572, %v576
  %v578 = vadd.f32 %v567, %v577
  %v579 = vxor.u32 %v578, 2147483648
  %v580 = vmul.f32 %v579, 1.442695
  %v581 = vpow.pop %v580
  %v582 = vadd.f32 %v581, 1.0
  %v583 = vrcp.pop %v582
  %v584 = vmul.f32 1.0, %v583
  %585 = vst [vmem:[%s7] sm:$0x1] %v584
  // Predicated region
  $region30: #{mlp_forward.1} parent=0 // pred_check
    _
  $region31: #{mlp_forward.1} parent=0 // pred_check_branch
    %587 = sbr.rel (0) target = $region33
  $region32: #{mlp_forward.1} parent=0 // pred_region
    _
  $region33: #{mlp_forward.1} parent=0 // pred_fallthru
    _
  // Predicated region
  $region34: #{mlp_forward.1} parent=0 // pred_check
    _
  $region35: #{mlp_forward.1} parent=0 // pred_check_branch
    %589 = sbr.rel (0) target = $region37
  $region36: #{mlp_forward.1} parent=0 // pred_region
    _
  $region37: #{mlp_forward.1} parent=0 // pred_fallthru
    _

</llo_original>
